<compile_context>
chip_gen: v5e
topology: v5e:2x2
jax: 0.10.0
libtpu: 0.0.40
codegen_flags: <defaults>
</compile_context>

<pallas_src>
import functools

import jax
import jax.numpy as jnp
from jax.experimental import pallas as pl
from jax.experimental.pallas import tpu as pltpu

_LANE = 128      # lane granularity (last dim)
_SUBLANE = 8     # sublane granularity (second-to-last dim)


def _round_up(x: int, m: int) -> int:
    return ((x + m - 1) // m) * m


def _matmul_kernel_acc(w_ref, x_ref, o_ref, acc_ref):
    """General path: (tm, tn) output tile, K reduced over the innermost axis."""
    @pl.when(pl.program_id(2) == 0)
    def _init():
        acc_ref[...] = jnp.zeros_like(acc_ref)

    # bf16 x bf16 -> f32 accumulate on the MXU.
    acc_ref[...] += jnp.dot(
        w_ref[...], x_ref[...], preferred_element_type=jnp.float32
    )

    @pl.when(pl.program_id(2) == pl.num_programs(2) - 1)
    def _store():
        o_ref[...] = acc_ref[...].astype(o_ref.dtype)


def _matmul_kernel_single_k(w_ref, x_ref, o_ref):
    """Fast path when the whole K dim fits in one tile: no scratch accumulator."""
    o_ref[...] = jnp.dot(
        w_ref[...], x_ref[...], preferred_element_type=jnp.float32
    ).astype(o_ref.dtype)


@functools.partial(jax.jit, static_argnames=("tm", "tn", "tk"))
def linear_matmul(w: jax.Array, x: jax.Array, *, tm: int = 256, tn: int = 256,
                  tk: int = 512) -> jax.Array:
    """Computes w @ x with a tiled Pallas TPU kernel (bf16 MXU, f32 acc)."""
    M, K = w.shape
    K2, N = x.shape
    assert K == K2, f"inner dims must match, got {K} vs {K2}"

    out_dtype = jnp.promote_types(w.dtype, x.dtype)

    # bf16 operands for full MXU throughput; accumulation stays f32.
    w = w.astype(jnp.bfloat16)
    x = x.astype(jnp.bfloat16)

    # Clamp tile sizes to the (layout-rounded) problem while keeping blocks
    # legal: sublane dims multiples of 8, lane dims multiples of 128.
    tm = min(tm, _round_up(M, _SUBLANE))
    tk = min(tk, _round_up(K, _LANE))
    tn = min(tn, _round_up(N, _LANE))

    # Zero-pad so every dim is a whole number of tiles. Padding K with zeros
    # contributes nothing to the sum; padding N makes the output lane-dense.
    Mp, Kp, Np = _round_up(M, tm), _round_up(K, tk), _round_up(N, tn)
    if (Mp, Kp) != (M, K):
        w = jnp.pad(w, ((0, Mp - M), (0, Kp - K)))
    if (Kp, Np) != (K, N):
        x = jnp.pad(x, ((0, Kp - K), (0, Np - N)))

    nk = Kp // tk
    grid = (Mp // tm, Np // tn, nk)

    single_k = nk == 1
    kernel = _matmul_kernel_single_k if single_k else _matmul_kernel_acc
    scratch = [] if single_k else [pltpu.VMEM((tm, tn), jnp.float32)]

    y_padded = pl.pallas_call(
        kernel,
        out_shape=jax.ShapeDtypeStruct((Mp, Np), out_dtype),
        grid_spec=pltpu.PrefetchScalarGridSpec(
            num_scalar_prefetch=0,
            grid=grid,
            in_specs=[
                pl.BlockSpec((tm, tk), lambda i, j, k: (i, k)),
                pl.BlockSpec((tk, tn), lambda i, j, k: (k, j)),
            ],
            out_specs=pl.BlockSpec((tm, tn), lambda i, j, k: (i, j)),
            scratch_shapes=scratch,
        ),
        compiler_params=pltpu.CompilerParams(
            # M/N parallel -> shards across v7x's 2 TensorCores; K is a
            # reduction carried in the VMEM accumulator -> arbitrary.
            dimension_semantics=("parallel", "parallel", "arbitrary"),
            vmem_limit_bytes=32 * 1024 * 1024,
        ),
    )(w, x)

    if (Mp, Np) != (M, N):
        y_padded = y_padded[:M, :N]
    return y_padded


def retrieve_weights(key, out_features: int, hidden: int) -> jax.Array:
    # Deterministic stand-in for the `retrieve_weights` sub-module.
    # TODO(synk): the real sub-module derives w from `inputs`; modeled here as
    # a fixed weight-returning callable.
    return jax.random.normal(key, (out_features, hidden), dtype=jnp.float32)


class LinearModule:
    """JAX/Pallas mirror of the PyTorch LinearModule."""

    def __init__(self, retrieve_weights_fn):
        self.retrieve_weights = retrieve_weights_fn

    def __call__(self, x: jax.Array, inputs) -> jax.Array:
        w = self.retrieve_weights(inputs)
        y = linear_matmul(w, x)
        return y


if __name__ == "__main__":
    key = jax.random.PRNGKey(0)
    k_w, k_x = jax.random.split(key)

    out_features = 32   # M
    hidden = 32         # K
    seq = 8             # N

    w = retrieve_weights(k_w, out_features, hidden)
    module = LinearModule(lambda inputs: w)

    # Activation x: (hidden, seq) so that w @ x matches the PyTorch semantics.
    x = jax.random.normal(k_x, (hidden, seq), dtype=jnp.float32)

    y = module(x, inputs=None)
    y = jax.block_until_ready(y)

    assert y.shape == (out_features, seq)
    assert y.dtype == jnp.float32

    # Reference with the same numerics as the kernel (bf16 operands, f32 acc).
    y_ref_bf16 = jnp.dot(
        w.astype(jnp.bfloat16), x.astype(jnp.bfloat16),
        preferred_element_type=jnp.float32,
    )
    assert jnp.allclose(y, y_ref_bf16, atol=1e-2, rtol=1e-2)

    # Loose sanity check against the full-f32 matmul.
    assert jnp.allclose(y, w @ x, atol=2.5e-1, rtol=5e-2)

    # Also exercise the multi-K-tile accumulator path at a larger shape.
    M2, K2, N2 = 384, 1536, 256
    w2 = jax.random.normal(jax.random.PRNGKey(1), (M2, K2), dtype=jnp.float32)
    x2 = jax.random.normal(jax.random.PRNGKey(2), (K2, N2), dtype=jnp.float32)
    y2 = jax.block_until_ready(linear_matmul(w2, x2))
    y2_ref = jnp.dot(
        w2.astype(jnp.bfloat16), x2.astype(jnp.bfloat16),
        preferred_element_type=jnp.float32,
    )
    assert y2.shape == (M2, N2)
    assert jnp.allclose(y2, y2_ref, atol=1e-1, rtol=1e-2)

    print("KERNEL_OK")
</pallas_src>

<mosaic_0001>
module attributes {stable_mosaic.version = 11 : i64} {
  func.func @_matmul_kernel_single_k(%arg0: i32, %arg1: i32, %arg2: i32, %arg3: memref<32x128xbf16, #tpu.memory_space<vmem>>, %arg4: memref<128x128xbf16, #tpu.memory_space<vmem>>, %arg5: memref<32x128xf32, #tpu.memory_space<vmem>>) attributes {dimension_semantics = [#tpu.dimension_semantics<parallel>, #tpu.dimension_semantics<parallel>, #tpu.dimension_semantics<arbitrary>], iteration_bounds = array<i64: 1, 1, 1>, scalar_prefetch = 0 : i64, scratch_operands = 0 : i64, tpu.core_type = #tpu.core_type<tc>, window_params = [{transform_indices = @transform_0, window_bounds = array<i64: 32, 128>}, {transform_indices = @transform_1, window_bounds = array<i64: 128, 128>}, {transform_indices = @transform_2, window_bounds = array<i64: 32, 128>}]} {
    %c0 = arith.constant 0 : index
    %c0_0 = arith.constant 0 : index
    %0 = vector.load %arg3[%c0, %c0_0] : memref<32x128xbf16, #tpu.memory_space<vmem>>, vector<32x128xbf16>
    %c0_1 = arith.constant 0 : index
    %c0_2 = arith.constant 0 : index
    %1 = vector.load %arg4[%c0_1, %c0_2] : memref<128x128xbf16, #tpu.memory_space<vmem>>, vector<128x128xbf16>
    %cst = arith.constant dense<0.000000e+00> : vector<32x128xf32>
    %2 = tpu.matmul %0, %1, %cst {dimension_numbers = #tpu.dot_dimension_numbers<[1], [0], [0], [1], [0, 0, 1, 1], [], []>} : vector<32x128xbf16>, vector<128x128xbf16>, vector<32x128xf32> -> vector<32x128xf32>
    %c0_3 = arith.constant 0 : index
    %c0_4 = arith.constant 0 : index
    %3 = vector.load %arg5[%c0_3, %c0_4] : memref<32x128xf32, #tpu.memory_space<vmem>>, vector<32x128xf32>
    tpu.vector_store %arg5[%c0_3, %c0_4], %2 {strides = array<i32>} : memref<32x128xf32, #tpu.memory_space<vmem>>, vector<32x128xf32>,
    return
  }
  func.func @transform_0(%arg0: i32, %arg1: i32, %arg2: i32) -> (i32, i32) {
    %c0_i32 = arith.constant 0 : i32
    return %arg0, %arg2 : i32, i32
  }
  func.func @transform_1(%arg0: i32, %arg1: i32, %arg2: i32) -> (i32, i32) {
    %c0_i32 = arith.constant 0 : i32
    return %arg2, %arg1 : i32, i32
  }
  func.func @transform_2(%arg0: i32, %arg1: i32, %arg2: i32) -> (i32, i32) {
    %c0_i32 = arith.constant 0 : i32
    return %arg0, %arg1 : i32, i32
  }
}

</mosaic_0001>

<llo_original>
// kernel: linear_matmul.1
$region0: #{linear_matmul.1}
  #allocation0 [shape = 'u32[]', space=smem, size = 0x4, offset = 0x4, fixed_abs, tag = 'smem constant byte address 0x4 - core index']
  #allocation1 [shape = 'u32[72,128]{1,0:T(1,128)}', space=vmem, size = 0x9000, scoped, tag = 'internal scratch']
  %s0 = inlined_call_operand.vmem [shape: bf16[32,128], index: 0, kind: input, shape index: {}]
  %s1 = inlined_call_operand.vmem [shape: bf16[128,128], index: 1, kind: input, shape index: {}]
  %s2 = inlined_call_operand.vmem [shape: f32[32,128], index: 2, kind: output, shape index: {}]
  %s3 = sld [smem:[#allocation0]]
  $region18: #{linear_matmul.1} parent=0
    _
  %s5 = ssub.s32 1, %s3
  %s6 = scalar_select 0, %s5, %s3
  // Predicated region
  $region2: #{linear_matmul.1} parent=0 // pred_check
    _
  $region3: #{linear_matmul.1} parent=0 // pred_check_branch
    %8 = sbr.rel (0) target = $region5
  $region4: #{linear_matmul.1} parent=0 // pred_region
    _
  $region5: #{linear_matmul.1} parent=0 // pred_fallthru
    _
  // Predicated region
  $region6: #{linear_matmul.1} parent=0 // pred_check
    _
  $region7: #{linear_matmul.1} parent=0 // pred_check_branch
    %10 = sbr.rel (0) target = $region9
  $region8: #{linear_matmul.1} parent=0 // pred_region
    _
  $region9: #{linear_matmul.1} parent=0 // pred_fallthru
    _
  %v11 = vld [vmem:[%s0] sm:$0xf]
  %v12 = vld [vmem:[%s0 + $0x4] sm:$0xf]
  %v13 = vld [vmem:[%s0 + $0x8] sm:$0xf]
  %v14 = vld [vmem:[%s0 + $0xc] sm:$0xf]
  %v15 = vld [vmem:[%s1] sm:$0xf]
  %v16 = vld [vmem:[%s1 + $0x4] sm:$0xf]
  %v17 = vld [vmem:[%s1 + $0x8] sm:$0xf]
  %v18 = vld [vmem:[%s1 + $0xc] sm:$0xf]
  %v19 = vld [vmem:[%s1 + $0x10] sm:$0xf]
  %v20 = vld [vmem:[%s1 + $0x14] sm:$0xf]
  %v21 = vld [vmem:[%s1 + $0x18] sm:$0xf]
  %v22 = vld [vmem:[%s1 + $0x1c] sm:$0xf]
  %v23 = vld [vmem:[%s1 + $0x20] sm:$0xf]
  %v24 = vld [vmem:[%s1 + $0x24] sm:$0xf]
  %v25 = vld [vmem:[%s1 + $0x28] sm:$0xf]
  %v26 = vld [vmem:[%s1 + $0x2c] sm:$0xf]
  %v27 = vld [vmem:[%s1 + $0x30] sm:$0xf]
  %v28 = vld [vmem:[%s1 + $0x34] sm:$0xf]
  %v29 = vld [vmem:[%s1 + $0x38] sm:$0xf]
  %v30 = vld [vmem:[%s1 + $0x3c] sm:$0xf]
  %v35 = vunpack.c.l.b16 %v11
  %v36 = vunpack.c.l.b16 %v12
  %v37 = vunpack.c.l.b16 %v13
  %v38 = vunpack.c.l.b16 %v14
  %v39 = vpack.c.b16 %v36, %v35
  %v40 = vpack.c.b16 %v38, %v37
  %v59 = vunpack.c.l.b16 %v15
  %v60 = vunpack.c.l.b16 %v16
  %v61 = vunpack.c.l.b16 %v17
  %v62 = vunpack.c.l.b16 %v18
  %v63 = vunpack.c.l.b16 %v19
  %v64 = vunpack.c.l.b16 %v20
  %v65 = vunpack.c.l.b16 %v21
  %v66 = vunpack.c.l.b16 %v22
  %v67 = vunpack.c.l.b16 %v23
  %v68 = vunpack.c.l.b16 %v24
  %v69 = vunpack.c.l.b16 %v25
  %v70 = vunpack.c.l.b16 %v26
  %v71 = vunpack.c.l.b16 %v27
  %v72 = vunpack.c.l.b16 %v28
  %v73 = vunpack.c.l.b16 %v29
  %v74 = vunpack.c.l.b16 %v30
  %v75 = vpack.c.b16 %v60, %v59
  %v76 = vpack.c.b16 %v62, %v61
  %v77 = vpack.c.b16 %v64, %v63
  %v78 = vpack.c.b16 %v66, %v65
  %v79 = vpack.c.b16 %v68, %v67
  %v80 = vpack.c.b16 %v70, %v69
  %v81 = vpack.c.b16 %v72, %v71
  %v82 = vpack.c.b16 %v74, %v73
  %91 = vmatpush.bf16.msra.mxu0 %v82
  %92 = vmatpush.bf16.msra.mxu0 %v81
  %93 = vmatpush.bf16.msra.mxu0 %v80
  %94 = vmatpush.bf16.msra.mxu0 %v79
  %95 = vmatpush.bf16.msra.mxu0 %v78
  %96 = vmatpush.bf16.msra.mxu0 %v77
  %97 = vmatpush.bf16.msra.mxu0 %v76
  %98 = vmatpush.bf16.msra.mxu0 %v75
  %99 = vmatmul.bf16.gmra.mxu0 %v39
  %v100 = vpop.f32.mrf.mxu0
  %v101 = vadd.f32 0.0, %v100
  %v102 = vpop.f32.mrf.mxu0
  %v103 = vadd.f32 0.0, %v102
  %104 = vmatmul.bf16.gmra.mxu0 %v40
  %v105 = vpop.f32.mrf.mxu0
  %v106 = vadd.f32 0.0, %v105
  %v107 = vpop.f32.mrf.mxu0
  %v108 = vadd.f32 0.0, %v107
  %109 = vdwg.mxu0
  %110 = vst [vmem:[%s2] sm:$0xff] %v101
  %111 = vst [vmem:[%s2 + $0x8] sm:$0xff] %v103
  %112 = vst [vmem:[%s2 + $0x10] sm:$0xff] %v106
  %113 = vst [vmem:[%s2 + $0x18] sm:$0xff] %v108
  // Predicated region
  $region10: #{linear_matmul.1} parent=0 // pred_check
    _
  $region11: #{linear_matmul.1} parent=0 // pred_check_branch
    %115 = sbr.rel (0) target = $region13
  $region12: #{linear_matmul.1} parent=0 // pred_region
    _
  $region13: #{linear_matmul.1} parent=0 // pred_fallthru
    _
  // Predicated region
  $region14: #{linear_matmul.1} parent=0 // pred_check
    _
  $region15: #{linear_matmul.1} parent=0 // pred_check_branch
    %117 = sbr.rel (0) target = $region17
  $region16: #{linear_matmul.1} parent=0 // pred_region
    _
  $region17: #{linear_matmul.1} parent=0 // pred_fallthru
    _

</llo_original>
